<compile_context>
chip_gen: v5e
topology: v5e:2x2
jax: 0.10.0
libtpu: 0.0.40
codegen_flags: <defaults>
</compile_context>

<pallas_src>
import jax
import jax.numpy as jnp
from jax.experimental import pallas as pl
from jax.experimental.pallas import tpu as pltpu

LANE = 128
SUBLANE = 8
MIN_GRID_STEPS = 8   # >= 4 grid steps per TensorCore on v7x megacore


def _round_up(v, m):
    return ((v + m - 1) // m) * m


def _vmem_capacity_bytes():
    try:
        return int(pltpu.get_tpu_info().vmem_capacity_bytes)
    except Exception:
        return 64 * 1024 * 1024   # conservative (v7x) fallback


def router_kernel(x_ref, w1cat_ref, b1cat_ref, w2_ref, b2_ref, out_ref):
    h_pad = w1cat_ref.shape[1] // 2                       # static

    # bf16 MXU operands, f32 accumulation; biases added in f32 after the dot.
    xb = x_ref[...].astype(jnp.bfloat16)                  # (TILE_N, D)
    h = jnp.dot(xb, w1cat_ref[...],
                preferred_element_type=jnp.float32) + b1cat_ref[...]

    # Split at the 128-lane boundary between the W1 and W1g halves.
    gate = jax.nn.sigmoid(h[:, h_pad:])
    h1 = jnp.tanh(h[:, :h_pad] * gate)
    # TODO(synk): if the single EUP slot binds on v6e/v7x after the HBM fixes,
    # run the sigmoid/tanh path in bf16 there (keep f32 on v5e: no bf16 EUP).

    logits = jnp.dot(h1.astype(jnp.bfloat16), w2_ref[...],
                     preferred_element_type=jnp.float32) + b2_ref[...]

    # Numerically stable softmax over the expert axis; exact divide so every
    # row sums to 1 to f32 precision.
    logits = logits - jnp.max(logits, axis=1, keepdims=True)
    p = jnp.exp(logits)
    out_ref[...] = (p / jnp.sum(p, axis=1, keepdims=True)).astype(out_ref.dtype)


def _vmem_bytes(tile_n, d, h_pad, e):
    """Resident weights + double-buffered x/out tiles + kernel intermediates."""
    weights = (d * 2 * h_pad + h_pad * e) * 2 + (2 * h_pad + e) * 4   # bf16 W, f32 b
    streams = 2 * tile_n * d * 4 + 2 * tile_n * e * 4                 # x / out double buffers
    inter = tile_n * (2 * d + 24 * h_pad + 12 * e)                    # bf16 x copy + ~3 f32 temps
    return weights + streams + inter


def _pick_tile_n(n, d, h_pad, e):
    """Largest tile that fits the VMEM budget while leaving >= MIN_GRID_STEPS
    grid steps (DMA/compute pipelining + v7x two-TensorCore balance)."""
    n8 = _round_up(max(n, 1), SUBLANE)
    step_cap = _round_up(max(-(-n // MIN_GRID_STEPS), SUBLANE), SUBLANE)
    vmem_cap = int(_vmem_capacity_bytes() * 0.6)
    tile = SUBLANE
    for cand in (8, 16, 32, 64, 128, 256, 512, 1024, 2048, 4096, 8192, 16384):
        if cand > n8 or cand > step_cap:
            break
        if _vmem_bytes(cand, d, h_pad, e) <= vmem_cap:
            tile = cand
    return tile


def two_layer_router_with_glu(x, params):
    """x: (N, input_dim). params: (fan_in, fan_out) weights, (1, fan_out) biases."""
    n, d = x.shape
    hdim = params["w1"].shape[1]
    e = params["w2"].shape[1]
    h_pad = _round_up(hdim, LANE)

    def pad2(a, rows, cols, dtype):
        a = a.astype(jnp.float32)
        a = jnp.pad(a, ((0, rows - a.shape[0]), (0, cols - a.shape[1])))
        return a.astype(dtype)

    # Fuse layer-1 weights into one (D, 2*h_pad) RHS -> a single MXU matmul.
    # Zero-padding the hidden dim is an exact no-op: padded columns give
    # h1 = tanh(0 * sigmoid(0)) = 0 and W2's padded rows are zero.
    w1cat = jnp.concatenate([pad2(params["w1"], d, h_pad, jnp.bfloat16),
                             pad2(params["w1g"], d, h_pad, jnp.bfloat16)], axis=1)
    b1cat = jnp.concatenate([pad2(params["b1"], 1, h_pad, jnp.float32),
                             pad2(params["b1g"], 1, h_pad, jnp.float32)], axis=1)
    w2 = pad2(params["w2"], h_pad, e, jnp.bfloat16)
    b2 = params["b2"].astype(jnp.float32)

    tile_n = _pick_tile_n(n, d, h_pad, e)
    budget = _vmem_bytes(tile_n, d, h_pad, e)
    capacity = _vmem_capacity_bytes()
    vmem_limit = int(min(capacity * 3 // 4,
                         max(32 * 1024 * 1024, budget * 5 // 4)))

    resident = dict(pipeline_mode=pl.Buffered(1))   # constant across grid steps

    out = pl.pallas_call(
        router_kernel,
        out_shape=jax.ShapeDtypeStruct((n, e), jnp.float32),
        grid_spec=pltpu.PrefetchScalarGridSpec(
            num_scalar_prefetch=0,
            grid=(pl.cdiv(n, tile_n),),
            in_specs=[
                pl.BlockSpec((tile_n, d), lambda i: (i, 0)),                   # x (streamed)
                pl.BlockSpec((d, 2 * h_pad), lambda i: (0, 0), **resident),    # W1|W1g
                pl.BlockSpec((1, 2 * h_pad), lambda i: (0, 0), **resident),    # b1|b1g
                pl.BlockSpec((h_pad, e), lambda i: (0, 0), **resident),        # W2
                pl.BlockSpec((1, e), lambda i: (0, 0), **resident),            # b2
            ],
            out_specs=pl.BlockSpec((tile_n, e), lambda i: (i, 0)),
        ),
        compiler_params=pltpu.CompilerParams(
            dimension_semantics=("parallel",),   # megacore split on v7x
            vmem_limit_bytes=vmem_limit,
        ),
    )(x.astype(jnp.float32), w1cat, b1cat, w2, b2)

    return out


def init_params(key, input_dim, hidden_dim, num_experts):
    """Deterministic PyTorch-Linear-style init (uniform +/- 1/sqrt(fan_in))."""
    ks = jax.random.split(key, 6)

    def lin(kw, kb, fan_in, fan_out):
        bound = 1.0 / (fan_in ** 0.5)
        w = jax.random.uniform(kw, (fan_in, fan_out), jnp.float32, -bound, bound)
        b = jax.random.uniform(kb, (1, fan_out), jnp.float32, -bound, bound)
        return w, b

    w1, b1 = lin(ks[0], ks[1], input_dim, hidden_dim)
    w1g, b1g = lin(ks[2], ks[3], input_dim, hidden_dim)
    w2, b2 = lin(ks[4], ks[5], hidden_dim, num_experts)
    return {"w1": w1, "b1": b1, "w1g": w1g, "b1g": b1g, "w2": w2, "b2": b2}


def reference(x, p):
    h1 = x @ p["w1"] + p["b1"]
    glu = jax.nn.sigmoid(x @ p["w1g"] + p["b1g"])
    h1 = jnp.tanh(h1 * glu)
    h2 = h1 @ p["w2"] + p["b2"]
    return jax.nn.softmax(h2, axis=1)


if __name__ == "__main__":
    # N=26 exercises a multi-step grid (tile_n=8 -> 4 steps) including a
    # masked partial last block; H is lane-padded inside the wrapper, D/E
    # stream unpadded.
    N, INPUT_DIM, HIDDEN_DIM, NUM_EXPERTS = 26, 32, 32, 8

    key = jax.random.PRNGKey(0)
    k_x, k_p = jax.random.split(key)
    x = jax.random.normal(k_x, (N, INPUT_DIM), jnp.float32)
    params = init_params(k_p, INPUT_DIM, HIDDEN_DIM, NUM_EXPERTS)

    router = jax.jit(two_layer_router_with_glu)
    out = jax.block_until_ready(router(x, params))
    ref = reference(x, params)

    assert out.shape == (N, NUM_EXPERTS)
    # bf16 matmul operands (f32 accumulation) -> modest elementwise tolerance
    assert jnp.allclose(out, ref, atol=2e-2, rtol=2e-2), (
        float(jnp.max(jnp.abs(out - ref))))
    # exact softmax divide -> rows sum to 1 tightly
    assert jnp.allclose(jnp.sum(out, axis=1), jnp.ones((N,)), atol=1e-3)

    print("KERNEL_OK")
</pallas_src>

<mosaic_0001>
module attributes {stable_mosaic.version = 11 : i64} {
  func.func @router_kernel(%arg0: i32, %arg1: memref<8x32xf32, #tpu.memory_space<vmem>>, %arg2: memref<32x256xbf16, #tpu.memory_space<vmem>>, %arg3: memref<1x256xf32, #tpu.memory_space<vmem>>, %arg4: memref<128x8xbf16, #tpu.memory_space<vmem>>, %arg5: memref<1x8xf32, #tpu.memory_space<vmem>>, %arg6: memref<8x8xf32, #tpu.memory_space<vmem>>) attributes {dimension_semantics = [#tpu.dimension_semantics<parallel>], iteration_bounds = array<i64: 4>, scalar_prefetch = 0 : i64, scratch_operands = 0 : i64, tpu.core_type = #tpu.core_type<tc>, window_params = [{transform_indices = @transform_0, window_bounds = array<i64: 8, 32>}, {pipeline_mode = #tpu.pipeline_mode<synchronous>, transform_indices = @transform_1, window_bounds = array<i64: 32, 256>}, {pipeline_mode = #tpu.pipeline_mode<synchronous>, transform_indices = @transform_2, window_bounds = array<i64: 1, 256>}, {pipeline_mode = #tpu.pipeline_mode<synchronous>, transform_indices = @transform_3, window_bounds = array<i64: 128, 8>}, {pipeline_mode = #tpu.pipeline_mode<synchronous>, transform_indices = @transform_4, window_bounds = array<i64: 1, 8>}, {transform_indices = @transform_5, window_bounds = array<i64: 8, 8>}]} {
    %c0 = arith.constant 0 : index
    %c0_0 = arith.constant 0 : index
    %0 = vector.load %arg1[%c0, %c0_0] : memref<8x32xf32, #tpu.memory_space<vmem>>, vector<8x32xf32>
    %1 = arith.truncf %0 : vector<8x32xf32> to vector<8x32xbf16>
    %c0_1 = arith.constant 0 : index
    %c0_2 = arith.constant 0 : index
    %2 = vector.load %arg2[%c0_1, %c0_2] : memref<32x256xbf16, #tpu.memory_space<vmem>>, vector<32x256xbf16>
    %cst = arith.constant dense<0.000000e+00> : vector<8x256xf32>
    %3 = tpu.matmul %1, %2, %cst {dimension_numbers = #tpu.dot_dimension_numbers<[1], [0], [0], [1], [0, 0, 1, 1], [], []>} : vector<8x32xbf16>, vector<32x256xbf16>, vector<8x256xf32> -> vector<8x256xf32>
    %c0_3 = arith.constant 0 : index
    %c0_4 = arith.constant 0 : index
    %4 = vector.load %arg3[%c0_3, %c0_4] : memref<1x256xf32, #tpu.memory_space<vmem>>, vector<1x256xf32>
    %5 = vector.broadcast %4 : vector<1x256xf32> to vector<8x256xf32>
    %6 = arith.addf %3, %5 : vector<8x256xf32>
    %7 = vector.extract_strided_slice %6 {offsets = [0, 128], sizes = [8, 128], strides = [1, 1]} : vector<8x256xf32> to vector<8x128xf32>
    %8 = arith.negf %7 : vector<8x128xf32>
    %9 = math.exp %8 : vector<8x128xf32>
    %cst_5 = arith.constant 1.000000e+00 : f32
    %10 = vector.broadcast %cst_5 : f32 to vector<8x128xf32>
    %11 = arith.addf %10, %9 : vector<8x128xf32>
    %12 = arith.divf %10, %11 : vector<8x128xf32>
    %13 = vector.extract_strided_slice %6 {offsets = [0, 0], sizes = [8, 128], strides = [1, 1]} : vector<8x256xf32> to vector<8x128xf32>
    %14 = arith.mulf %13, %12 : vector<8x128xf32>
    %15 = math.tanh %14 : vector<8x128xf32>
    %16 = arith.truncf %15 : vector<8x128xf32> to vector<8x128xbf16>
    %c0_6 = arith.constant 0 : index
    %c0_7 = arith.constant 0 : index
    %17 = vector.load %arg4[%c0_6, %c0_7] : memref<128x8xbf16, #tpu.memory_space<vmem>>, vector<128x8xbf16>
    %cst_8 = arith.constant dense<0.000000e+00> : vector<8x8xf32>
    %18 = tpu.matmul %16, %17, %cst_8 {dimension_numbers = #tpu.dot_dimension_numbers<[1], [0], [0], [1], [0, 0, 1, 1], [], []>} : vector<8x128xbf16>, vector<128x8xbf16>, vector<8x8xf32> -> vector<8x8xf32>
    %c0_9 = arith.constant 0 : index
    %c0_10 = arith.constant 0 : index
    %19 = vector.load %arg5[%c0_9, %c0_10] : memref<1x8xf32, #tpu.memory_space<vmem>>, vector<1x8xf32>
    %20 = vector.broadcast %19 : vector<1x8xf32> to vector<8x8xf32>
    %21 = arith.addf %18, %20 : vector<8x8xf32>
    %cst_11 = arith.constant dense<0xFF800000> : vector<8xf32>
    %22 = vector.multi_reduction <maximumf>, %21, %cst_11 [1] : vector<8x8xf32> to vector<8xf32>
    %23 = vector.shape_cast %22 : vector<8xf32> to vector<8x1xf32>
    %24 = vector.broadcast %23 : vector<8x1xf32> to vector<8x8xf32>
    %25 = arith.subf %21, %24 : vector<8x8xf32>
    %26 = math.exp %25 : vector<8x8xf32>
    %cst_12 = arith.constant dense<0.000000e+00> : vector<8xf32>
    %27 = vector.multi_reduction <add>, %26, %cst_12 [1] : vector<8x8xf32> to vector<8xf32>
    %28 = vector.shape_cast %27 : vector<8xf32> to vector<8x1xf32>
    %29 = vector.broadcast %28 : vector<8x1xf32> to vector<8x8xf32>
    %30 = arith.divf %26, %29 : vector<8x8xf32>
    %c0_13 = arith.constant 0 : index
    %c0_14 = arith.constant 0 : index
    %31 = vector.load %arg6[%c0_13, %c0_14] : memref<8x8xf32, #tpu.memory_space<vmem>>, vector<8x8xf32>
    tpu.vector_store %arg6[%c0_13, %c0_14], %30 {strides = array<i32>} : memref<8x8xf32, #tpu.memory_space<vmem>>, vector<8x8xf32>,
    return
  }
  func.func @transform_0(%arg0: i32) -> (i32, i32) {
    %c0_i32 = arith.constant 0 : i32
    %c0_i32_0 = arith.constant 0 : i32
    return %arg0, %c0_i32 : i32, i32
  }
  func.func @transform_1(%arg0: i32) -> (i32, i32) {
    %c0_i32 = arith.constant 0 : i32
    %c0_i32_0 = arith.constant 0 : i32
    %c0_i32_1 = arith.constant 0 : i32
    return %c0_i32, %c0_i32_0 : i32, i32
  }
  func.func @transform_2(%arg0: i32) -> (i32, i32) {
    %c0_i32 = arith.constant 0 : i32
    %c0_i32_0 = arith.constant 0 : i32
    %c0_i32_1 = arith.constant 0 : i32
    return %c0_i32, %c0_i32_0 : i32, i32
  }
  func.func @transform_3(%arg0: i32) -> (i32, i32) {
    %c0_i32 = arith.constant 0 : i32
    %c0_i32_0 = arith.constant 0 : i32
    %c0_i32_1 = arith.constant 0 : i32
    return %c0_i32, %c0_i32_0 : i32, i32
  }
  func.func @transform_4(%arg0: i32) -> (i32, i32) {
    %c0_i32 = arith.constant 0 : i32
    %c0_i32_0 = arith.constant 0 : i32
    %c0_i32_1 = arith.constant 0 : i32
    return %c0_i32, %c0_i32_0 : i32, i32
  }
  func.func @transform_5(%arg0: i32) -> (i32, i32) {
    %c0_i32 = arith.constant 0 : i32
    %c0_i32_0 = arith.constant 0 : i32
    return %arg0, %c0_i32 : i32, i32
  }
}

</mosaic_0001>

<llo_original>
// kernel: two_layer_router_with_glu.1
$region0: #{two_layer_router_with_glu.1}
  #allocation0 [shape = 'u32[]', space=smem, size = 0x4, offset = 0x4, fixed_abs, tag = 'smem constant byte address 0x4 - core index']
  #allocation1 [shape = 'u32[72,128]{1,0:T(1,128)}', space=vmem, size = 0x9000, scoped, tag = 'internal scratch']
  %s0 = inlined_call_operand.vmem [shape: f32[26,32], index: 0, kind: input, shape index: {}]
  %s1 = inlined_call_operand.vmem [shape: bf16[32,256], index: 1, kind: input, shape index: {}]
  %s2 = inlined_call_operand.vmem [shape: f32[1,256], index: 2, kind: input, shape index: {}]
  %s3 = inlined_call_operand.vmem [shape: bf16[128,8], index: 3, kind: input, shape index: {}]
  %s4 = inlined_call_operand.vmem [shape: f32[1,8], index: 4, kind: input, shape index: {}]
  %s5 = inlined_call_operand.vmem [shape: f32[26,8], index: 5, kind: output, shape index: {}]
  %s6 = sld [smem:[#allocation0]]
  $region53: #{two_layer_router_with_glu.1} parent=0
    _
  %s8 = ssub.s32 1, %s6
  %s9 = scalar_select 0, %s8, %s6
  loop: start=0, step=1, limit=6
  $region2: #{two_layer_router_with_glu.1} parent=0 // loop_pre_header
    _
  $region3: #{two_layer_router_with_glu.1} parent=0 // loop_header
    %s11 = sphi 0, %s15
    %p12 = scmp.ge.s32.totalorder %s11, 6
    %s21 = sphi 0, %s23
    %s24 = sphi 0, %s21
    %s25 = sphi 0, %s24
    %s41 = sphi 0, %s25
    %s45 = sphi 0, %s45
    %s47 = sphi 0, %s45
    %s48 = sphi 0, %s47
    %s62 = sphi 0, %s48
    %s66 = sphi 0, %s66
    %s68 = sphi 0, %s66
    %s69 = sphi 0, %s68
    %s83 = sphi 0, %s69
    %s87 = sphi 0, %s87
    %s89 = sphi 0, %s87
    %s90 = sphi 0, %s89
    %s104 = sphi 0, %s90
    %s108 = sphi 0, %s108
    %s110 = sphi 0, %s108
    %s111 = sphi 0, %s110
    %s125 = sphi 0, %s111
    %s131 = sphi 0, %s133
    %s134 = sphi 0, %s131
    %s135 = sphi 0, %s134
    %s151 = sphi 0, %s135
  $region4: #{two_layer_router_with_glu.1} parent=0 // loop_header_branch
    %14 = sbr.rel (%p12) target = $region8
  $region5: #{two_layer_router_with_glu.1} parent=0 // loop_body
    %s16 = ssub.s32 %s11, 1
    %s17 = ssub.s32 %s11, 2
    %s18 = sadd.s32 %s11, 1
    %s19 = ssub.s32 %s11, %s18
    %p20 = scmp.eq.s32.totalorder %s19, 0
    %s22 = sadd.s32 %s21, 1
    %s23 = scalar_select %p20, %s21, %s22
    %p26 = pneg %p20
    %p27 = scmp.eq.s32.totalorder %s11, 3
    %p28 = por %p26, %p27
    %p29 = scmp.ne.s32.totalorder %s21, %s24
    %p30 = scmp.eq.s32.totalorder %s11, 0
    %p31 = por %p29, %p30
    %p32 = scmp.ne.s32.totalorder %s21, %s24
    %p33 = scmp.eq.s32.totalorder %s16, 3
    %p34 = por %p32, %p33
    %p35 = scmp.ne.s32.totalorder %s24, %s25
    %p36 = scmp.eq.s32.totalorder %s16, 0
    %p37 = por %p35, %p36
    %p38 = scmp.ne.s32.totalorder %s24, %s25
    %p39 = scmp.eq.s32.totalorder %s17, 3
    %p40 = por %p38, %p39
    %p42 = scmp.ne.s32.totalorder %s25, %s41
    %p43 = scmp.eq.s32.totalorder %s17, 0
    %p44 = por %p42, %p43
    %s46 = sadd.s32 %s45, 1
    %p49 = scmp.eq.s32.totalorder %s11, 3
    %p50 = scmp.ne.s32.totalorder %s45, %s47
    %p51 = scmp.eq.s32.totalorder %s11, 0
    %p52 = por %p50, %p51
    %p53 = scmp.ne.s32.totalorder %s45, %s47
    %p54 = scmp.eq.s32.totalorder %s16, 3
    %p55 = por %p53, %p54
    %p56 = scmp.ne.s32.totalorder %s47, %s48
    %p57 = scmp.eq.s32.totalorder %s16, 0
    %p58 = por %p56, %p57
    %p59 = scmp.ne.s32.totalorder %s47, %s48
    %p60 = scmp.eq.s32.totalorder %s17, 3
    %p61 = por %p59, %p60
    %p63 = scmp.ne.s32.totalorder %s48, %s62
    %p64 = scmp.eq.s32.totalorder %s17, 0
    %p65 = por %p63, %p64
    %s67 = sadd.s32 %s66, 1
    %p70 = scmp.eq.s32.totalorder %s11, 3
    %p71 = scmp.ne.s32.totalorder %s66, %s68
    %p72 = scmp.eq.s32.totalorder %s11, 0
    %p73 = por %p71, %p72
    %p74 = scmp.ne.s32.totalorder %s66, %s68
    %p75 = scmp.eq.s32.totalorder %s16, 3
    %p76 = por %p74, %p75
    %p77 = scmp.ne.s32.totalorder %s68, %s69
    %p78 = scmp.eq.s32.totalorder %s16, 0
    %p79 = por %p77, %p78
    %p80 = scmp.ne.s32.totalorder %s68, %s69
    %p81 = scmp.eq.s32.totalorder %s17, 3
    %p82 = por %p80, %p81
    %p84 = scmp.ne.s32.totalorder %s69, %s83
    %p85 = scmp.eq.s32.totalorder %s17, 0
    %p86 = por %p84, %p85
    %s88 = sadd.s32 %s87, 1
    %p91 = scmp.eq.s32.totalorder %s11, 3
    %p92 = scmp.ne.s32.totalorder %s87, %s89
    %p93 = scmp.eq.s32.totalorder %s11, 0
    %p94 = por %p92, %p93
    %p95 = scmp.ne.s32.totalorder %s87, %s89
    %p96 = scmp.eq.s32.totalorder %s16, 3
    %p97 = por %p95, %p96
    %p98 = scmp.ne.s32.totalorder %s89, %s90
    %p99 = scmp.eq.s32.totalorder %s16, 0
    %p100 = por %p98, %p99
    %p101 = scmp.ne.s32.totalorder %s89, %s90
    %p102 = scmp.eq.s32.totalorder %s17, 3
    %p103 = por %p101, %p102
    %p105 = scmp.ne.s32.totalorder %s90, %s104
    %p106 = scmp.eq.s32.totalorder %s17, 0
    %p107 = por %p105, %p106
    %s109 = sadd.s32 %s108, 1
    %p112 = scmp.eq.s32.totalorder %s11, 3
    %p113 = scmp.ne.s32.totalorder %s108, %s110
    %p114 = scmp.eq.s32.totalorder %s11, 0
    %p115 = por %p113, %p114
    %p116 = scmp.ne.s32.totalorder %s108, %s110
    %p117 = scmp.eq.s32.totalorder %s16, 3
    %p118 = por %p116, %p117
    %p119 = scmp.ne.s32.totalorder %s110, %s111
    %p120 = scmp.eq.s32.totalorder %s16, 0
    %p121 = por %p119, %p120
    %p122 = scmp.ne.s32.totalorder %s110, %s111
    %p123 = scmp.eq.s32.totalorder %s17, 3
    %p124 = por %p122, %p123
    %p126 = scmp.ne.s32.totalorder %s111, %s125
    %p127 = scmp.eq.s32.totalorder %s17, 0
    %p128 = por %p126, %p127
    %s129 = ssub.s32 %s11, %s18
    %p130 = scmp.eq.s32.totalorder %s129, 0
    %s132 = sadd.s32 %s131, 1
    %s133 = scalar_select %p130, %s131, %s132
    %p136 = pneg %p130
    %p137 = scmp.eq.s32.totalorder %s11, 3
    %p138 = por %p136, %p137
    %p139 = scmp.ne.s32.totalorder %s131, %s134
    %p140 = scmp.eq.s32.totalorder %s11, 0
    %p141 = por %p139, %p140
    %p142 = scmp.ne.s32.totalorder %s131, %s134
    %p143 = scmp.eq.s32.totalorder %s16, 3
    %p144 = por %p142, %p143
    %p145 = scmp.ne.s32.totalorder %s134, %s135
    %p146 = scmp.eq.s32.totalorder %s16, 0
    %p147 = por %p145, %p146
    %p148 = scmp.ne.s32.totalorder %s134, %s135
    %p149 = scmp.eq.s32.totalorder %s17, 3
    %p150 = por %p148, %p149
    %p152 = scmp.ne.s32.totalorder %s135, %s151
    %p153 = scmp.eq.s32.totalorder %s17, 0
    %p154 = por %p152, %p153
    %p155 = scmp.le.s32.totalorder 1, %s11
    %p156 = scmp.lt.s32.totalorder %s11, 5
    %p157 = pnand %p155, %p156
    %p158 = pneg %p157
    // Predicated region
    $region9: #{two_layer_router_with_glu.1} parent=5 // pred_check
      _
    $region10: #{two_layer_router_with_glu.1} parent=5 // pred_check_branch
      %160 = sbr.rel (%p157) target = $region12
    $region11: #{two_layer_router_with_glu.1} parent=5 // pred_region
      %s161 = ssub.s32 %s11, 1
      // Predicated region
      $region13: #{two_layer_router_with_glu.1} parent=11 // pred_check
        %p162 = pneg %p58
      $region14: #{two_layer_router_with_glu.1} parent=11 // pred_check_branch
        %164 = sbr.rel (%p162) target = $region16
      $region15: #{two_layer_router_with_glu.1} parent=11 // pred_region
        _
      $region16: #{two_layer_router_with_glu.1} parent=11 // pred_fallthru
        _
      // Predicated region
      $region17: #{two_layer_router_with_glu.1} parent=11 // pred_check
        %p165 = pneg %p79
      $region18: #{two_layer_router_with_glu.1} parent=11 // pred_check_branch
        %167 = sbr.rel (%p165) target = $region20
      $region19: #{two_layer_router_with_glu.1} parent=11 // pred_region
        _
      $region20: #{two_layer_router_with_glu.1} parent=11 // pred_fallthru
        _
      // Predicated region
      $region21: #{two_layer_router_with_glu.1} parent=11 // pred_check
        %p168 = pneg %p100
      $region22: #{two_layer_router_with_glu.1} parent=11 // pred_check_branch
        %170 = sbr.rel (%p168) target = $region24
      $region23: #{two_layer_router_with_glu.1} parent=11 // pred_region
        _
      $region24: #{two_layer_router_with_glu.1} parent=11 // pred_fallthru
        _
      // Predicated region
      $region25: #{two_layer_router_with_glu.1} parent=11 // pred_check
        %p171 = pneg %p121
      $region26: #{two_layer_router_with_glu.1} parent=11 // pred_check_branch
        %173 = sbr.rel (%p171) target = $region28
      $region27: #{two_layer_router_with_glu.1} parent=11 // pred_region
        _
      $region28: #{two_layer_router_with_glu.1} parent=11 // pred_fallthru
        _
    $region12: #{two_layer_router_with_glu.1} parent=5 // pred_fallthru
      _
    %p174 = scmp.lt.s32.totalorder %s11, 4
    // Predicated region
    $region29: #{two_layer_router_with_glu.1} parent=5 // pred_check
      %p175 = pneg %p174
    $region30: #{two_layer_router_with_glu.1} parent=5 // pred_check_branch
      %177 = sbr.rel (%p175) target = $region32
    $region31: #{two_layer_router_with_glu.1} parent=5 // pred_region
      // Predicated region
      $region33: #{two_layer_router_with_glu.1} parent=31 // pred_check
        %p178 = pneg %p31
      $region34: #{two_layer_router_with_glu.1} parent=31 // pred_check_branch
        %180 = sbr.rel (%p178) target = $region36
      $region35: #{two_layer_router_with_glu.1} parent=31 // pred_region
        %p181 = scmp.lt.s32.totalorder %s11, 3
        %s182 = scalar_select %p181, %s11, 3
        %s183 = smul.addr %s182, 8
        %s184 = scalar_lea.vmem %s0, %s183
      $region36: #{two_layer_router_with_glu.1} parent=31 // pred_fallthru
        _
    $region32: #{two_layer_router_with_glu.1} parent=5 // pred_fallthru
      _
    %p185 = scmp.le.s32.totalorder 1, %s11
    %p186 = scmp.lt.s32.totalorder %s11, 5
    %p187 = pnand %p185, %p186
    %p188 = pneg %p187
    // Predicated region
    $region37: #{two_layer_router_with_glu.1} parent=5 // pred_check
      _
    $region38: #{two_layer_router_with_glu.1} parent=5 // pred_check_branch
      %190 = sbr.rel (%p187) target = $region40
    $region39: #{two_layer_router_with_glu.1} parent=5 // pred_region
      %s191 = ssub.s32 %s11, 1
      %p192 = scmp.lt.s32.totalorder %s16, 3
      %s193 = scalar_select %p192, %s16, 3
      %s194 = smul.addr %s193, 8
      %s195 = scalar_lea.vmem %s0, %s194
      %p196 = pneg %p37
      %p197 = pneg %p34
      %p198 = pneg %p58
      %p199 = pneg %p55
      %p200 = pneg %p79
      %p201 = pneg %p76
      %p202 = pneg %p100
      %p203 = pneg %p97
      %p204 = pneg %p121
      %p205 = pneg %p118
      %p206 = pneg %p147
      %p207 = pneg %p144
      %p208 = scmp.lt.s32.totalorder %s16, 3
      %s209 = scalar_select %p208, %s16, 3
      %s210 = smul.addr %s209, 8
      %s211 = scalar_lea.vmem %s5, %s210
      %p212 = scmp.lt.s32.totalorder %s16, 3
      %s213 = scalar_select %p212, %s16, 3
      %s214 = smul.addr %s213, 8
      %s215 = scalar_lea.vmem %s0, %s214
      %p216 = scmp.lt.s32.totalorder %s16, 3
      %s217 = scalar_select %p216, %s16, 3
      %s218 = smul.addr %s217, 8
      %s219 = scalar_lea.vmem %s5, %s218
      %v221 = vld [vmem:[%s215] sm:$0xff]
      %v222 = vpack.c.bf16 %v221, %v221
      %v223 = vld [vmem:[%s1] sm:$0xff]
      %v224 = vld [vmem:[%s1 + $0x8] sm:$0xff]
      %v225 = vld [vmem:[%s1 + $0x10] sm:$0xff]
      %v226 = vld [vmem:[%s1 + $0x18] sm:$0xff]
      %v227 = vld [vmem:[%s2] sm:$0x3]
      %v229 = vperm.slane %v227, 0
      %v230 = vperm.slane %v227, 1
      %v237 = vunpack.c.l.b16 %v223
      %v238 = vunpack.c.h.b16 %v223
      %v239 = vunpack.c.l.b16 %v224
      %v240 = vunpack.c.h.b16 %v224
      %v241 = vunpack.c.l.b16 %v225
      %v242 = vunpack.c.h.b16 %v225
      %v243 = vunpack.c.l.b16 %v226
      %v244 = vunpack.c.h.b16 %v226
      %v245 = vpack.c.b16 %v239, %v237
      %v246 = vpack.c.b16 %v240, %v238
      %v247 = vpack.c.b16 %v243, %v241
      %v248 = vpack.c.b16 %v244, %v242
      %vm253 = vcmask 261120
      %v255 = vsel %vm253, %v222, 0
      %257 = vmatpush.bf16.msra.mxu0 0
      %258 = vmatpush.bf16.msra.mxu0 0
      %259 = vmatpush.bf16.msra.mxu0 0
      %260 = vmatpush.bf16.msra.mxu0 0
      %261 = vmatpush.bf16.msra.mxu0 0
      %262 = vmatpush.bf16.msra.mxu0 0
      %263 = vmatpush.bf16.msra.mxu0 %v247
      %264 = vmatpush.bf16.msra.mxu0 %v245
      %265 = vmatmul.bf16.gmra.mxu0 %v255
      %v266 = vpop.f32.mrf.mxu0
      %v267 = vadd.f32 %v229, %v266
      %v268 = vpop.f32.mrf.mxu0
      %269 = vdwg.mxu0
      %270 = vmatpush.bf16.msra.mxu0 0
      %271 = vmatpush.bf16.msra.mxu0 0
      %272 = vmatpush.bf16.msra.mxu0 0
      %273 = vmatpush.bf16.msra.mxu0 0
      %274 = vmatpush.bf16.msra.mxu0 0
      %275 = vmatpush.bf16.msra.mxu0 0
      %276 = vmatpush.bf16.msra.mxu0 %v248
      %277 = vmatpush.bf16.msra.mxu0 %v246
      %278 = vmatmul.bf16.gmra.mxu0 %v255
      %v279 = vpop.f32.mrf.mxu0
      %v280 = vadd.f32 %v230, %v279
      %v281 = vpop.f32.mrf.mxu0
      %282 = vdwg.mxu0
      %v283 = vxor.u32 %v280, 2147483648
      %v284 = vmul.f32 %v283, 1.442695
      %v285 = vpow.pop %v284
      %v286 = vadd.f32 %v285, 1.0
      %v287 = vrcp.pop %v286
      %v288 = vmul.f32 %v286, %v287
      %v289 = vsub.f32 1.0, %v288
      %v290 = vmul.f32 %v287, %v289
      %v291 = vadd.f32 %v287, %v290
      %vm292 = vweird.f32 %v286
      %vm293 = vweird.f32 %v287
      %vm294 = vmor %vm292, %vm293
      %v295 = vsel %vm294, %v287, %v291
      %v296 = vand.u32 2147483647, %v286
      %vm297 = vcmp.eq.f32.partialorder %v296, 8.507059e+37
      %v298 = vand.u32 %v286, 2147483648
      %v299 = vor.u32 1.1754944e-38, %v298
      %v300 = vsel %vm297, %v299, %v295
      %v301 = vmul.f32 1.0, %v300
      %v302 = vmul.f32 %v267, %v301
      %v303 = vtanh.pop %v302
      %v304 = vpack.c.bf16 %v303, %v303
      %v305 = vld [vmem:[%s3] sm:$0xf]
      %v306 = vld [vmem:[%s3 + $0x4] sm:$0xf]
      %v307 = vld [vmem:[%s3 + $0x8] sm:$0xf]
      %v308 = vld [vmem:[%s3 + $0xc] sm:$0xf]
      %v309 = vld [vmem:[%s3 + $0x10] sm:$0xf]
      %v310 = vld [vmem:[%s3 + $0x14] sm:$0xf]
      %v311 = vld [vmem:[%s3 + $0x18] sm:$0xf]
      %v312 = vld [vmem:[%s3 + $0x1c] sm:$0xf]
      %v313 = vld [vmem:[%s3 + $0x20] sm:$0xf]
      %v314 = vld [vmem:[%s3 + $0x24] sm:$0xf]
      %v315 = vld [vmem:[%s3 + $0x28] sm:$0xf]
      %v316 = vld [vmem:[%s3 + $0x2c] sm:$0xf]
      %v317 = vld [vmem:[%s3 + $0x30] sm:$0xf]
      %v318 = vld [vmem:[%s3 + $0x34] sm:$0xf]
      %v319 = vld [vmem:[%s3 + $0x38] sm:$0xf]
      %v320 = vld [vmem:[%s3 + $0x3c] sm:$0xf]
      %v321 = vld [vmem:[%s4] sm:$0x1]
      %v323 = vperm.slane %v321, 0
      %v341 = vunpack.c.l.b16 %v305
      %v342 = vunpack.c.l.b16 %v306
      %v343 = vunpack.c.l.b16 %v307
      %v344 = vunpack.c.l.b16 %v308
      %v345 = vunpack.c.l.b16 %v309
      %v346 = vunpack.c.l.b16 %v310
      %v347 = vunpack.c.l.b16 %v311
      %v348 = vunpack.c.l.b16 %v312
      %v349 = vunpack.c.l.b16 %v313
      %v350 = vunpack.c.l.b16 %v314
      %v351 = vunpack.c.l.b16 %v315
      %v352 = vunpack.c.l.b16 %v316
      %v353 = vunpack.c.l.b16 %v317
      %v354 = vunpack.c.l.b16 %v318
      %v355 = vunpack.c.l.b16 %v319
      %v356 = vunpack.c.l.b16 %v320
      %v357 = vpack.c.b16 %v342, %v341
      %v358 = vpack.c.b16 %v344, %v343
      %v359 = vpack.c.b16 %v346, %v345
      %v360 = vpack.c.b16 %v348, %v347
      %v361 = vpack.c.b16 %v350, %v349
      %v362 = vpack.c.b16 %v352, %v351
      %v363 = vpack.c.b16 %v354, %v353
      %v364 = vpack.c.b16 %v356, %v355
      %373 = vmatpush.bf16.msra.mxu0 %v364
      %374 = vmatpush.bf16.msra.mxu0 %v363
      %375 = vmatpush.bf16.msra.mxu0 %v362
      %376 = vmatpush.bf16.msra.mxu0 %v361
      %377 = vmatpush.bf16.msra.mxu0 %v360
      %378 = vmatpush.bf16.msra.mxu0 %v359
      %379 = vmatpush.bf16.msra.mxu0 %v358
      %380 = vmatpush.bf16.msra.mxu0 %v357
      %381 = vmatmul.bf16.gmra.mxu0 %v304
      %v382 = vpop.f32.mrf.mxu0
      %v383 = vadd.f32 %v323, %v382
      %v384 = vpop.f32.mrf.mxu0
      %385 = vdwg.mxu0
      %vm386 = vcmask 64512
      %v387 = vsel %vm386, %v383, -inf
      %388 = vmax.xlane.f32.xlu0 %v387
      %v389 = vpop.xlane.xlu0 %388
      %v390 = vsub.f32 %v383, %v389
      %v391 = vmul.f32 %v390, 1.442695
      %v392 = vpow.pop %v391
      %v393 = vsel %vm386, %v392, 0.0
      %394 = vadd.xlane.f32.xlu0 %v393
      %v395 = vpop.xlane.xlu0 %394
      %v396 = vrcp.pop %v395
      %v397 = vmul.f32 %v395, %v396
      %v398 = vsub.f32 1.0, %v397
      %v399 = vmul.f32 %v396, %v398
      %v400 = vadd.f32 %v396, %v399
      %vm401 = vweird.f32 %v395
      %vm402 = vweird.f32 %v396
      %vm403 = vmor %vm401, %vm402
      %v404 = vsel %vm403, %v396, %v400
      %v405 = vand.u32 2147483647, %v395
      %vm406 = vcmp.eq.f32.partialorder %v405, 8.507059e+37
      %v407 = vand.u32 %v395, 2147483648
      %v408 = vor.u32 1.1754944e-38, %v407
      %v409 = vsel %vm406, %v408, %v404
      %v410 = vmul.f32 %v392, %v409
      %411 = vst.msk [vmem:[%s219] sm:$0xff] %vm386, %v410
      %p412 = scmp.lt.s32.totalorder %s16, 3
      %s413 = scalar_select %p412, %s16, 3
      %s414 = smul.addr %s413, 8
      %s415 = scalar_lea.vmem %s5, %s414
      // Predicated region
      $region41: #{two_layer_router_with_glu.1} parent=39 // pred_check
        %p416 = pneg %p144
      $region42: #{two_layer_router_with_glu.1} parent=39 // pred_check_branch
        %418 = sbr.rel (%p416) target = $region44
      $region43: #{two_layer_router_with_glu.1} parent=39 // pred_region
        _
      $region44: #{two_layer_router_with_glu.1} parent=39 // pred_fallthru
        _
    $region40: #{two_layer_router_with_glu.1} parent=5 // pred_fallthru
      _
    %p419 = scmp.le.s32.totalorder 2, %s11
    // Predicated region
    $region45: #{two_layer_router_with_glu.1} parent=5 // pred_check
      %p420 = pneg %p419
    $region46: #{two_layer_router_with_glu.1} parent=5 // pred_check_branch
      %422 = sbr.rel (%p420) target = $region48
    $region47: #{two_layer_router_with_glu.1} parent=5 // pred_region
      %s423 = ssub.s32 %s11, 2
      // Predicated region
      $region49: #{two_layer_router_with_glu.1} parent=47 // pred_check
        %p424 = pneg %p150
      $region50: #{two_layer_router_with_glu.1} parent=47 // pred_check_branch
        %426 = sbr.rel (%p424) target = $region52
      $region51: #{two_layer_router_with_glu.1} parent=47 // pred_region
        %p427 = scmp.lt.s32.totalorder %s17, 3
        %s428 = scalar_select %p427, %s17, 3
        %s429 = smul.addr %s428, 8
        %s430 = scalar_lea.vmem %s5, %s429
      $region52: #{two_layer_router_with_glu.1} parent=47 // pred_fallthru
        _
    $region48: #{two_layer_router_with_glu.1} parent=5 // pred_fallthru
      _
  $region6: #{two_layer_router_with_glu.1} parent=0 // loop_footer
    %s15 = sadd.s32 1, %s11
  $region7: #{two_layer_router_with_glu.1} parent=0 // loop_footer_branch
    %10 = sbr.rel target = $region3
  $region8: #{two_layer_router_with_glu.1} parent=0 // loop_exit
    _

</llo_original>
